<compile_context>
chip_gen: v6e
topology: v6e:2x2x1
jax: 0.10.0
libtpu: 0.0.40
codegen_flags: <defaults>
</compile_context>

<pallas_src>
import jax
import jax.numpy as jnp
from jax.experimental import pallas as pl
from jax.experimental.pallas import tpu as pltpu

HIDDEN = 50        # logical hidden width (matches nn.Linear(inDim, 50))
HIDDEN_PAD = 128   # lane-dense padded hidden width (zero-filled)


def _round_up(x, m):
    return (x + m - 1) // m * m


def _pick_tn(out_dim):
    """Output-column tile: 256 on v6e/v7x (2x256^2 MXU), 128 on v5e; clamp for tiny out_dim."""
    try:
        kind = jax.devices()[0].device_kind.lower()
        is_v5e = ("v5e" in kind) or ("v5 lite" in kind) or ("v5lite" in kind)
    except Exception:  # pragma: no cover - defensive; default to the wide tile
        is_v5e = False
    tn = 128 if is_v5e else 256
    return min(tn, max(128, _round_up(out_dim, 128)))


# ----------------------------------------------------------------------------
# Kernel 1: fc1 + sigmoid, executed ONCE (hoisted out of the column-tile grid).
# ----------------------------------------------------------------------------
def fc1_kernel(x_ref, w1_ref, b1_ref, h_ref):
    # MXU on bf16 operands, f32 accumulate; sigmoid in f32 (v5e-safe EUP path).
    acc = jnp.dot(x_ref[...], w1_ref[...], preferred_element_type=jnp.float32)
    h_ref[...] = jax.nn.sigmoid(acc + b1_ref[...]).astype(h_ref.dtype)  # bf16 pack once


# ----------------------------------------------------------------------------
# Kernel 2: fc3 column tile + softmax over dim=0 (batch axis).
# ----------------------------------------------------------------------------
def fc3_softmax_kernel(h_ref, w2_ref, out_ref):
    # fc3 column tile (bias omitted: cancels exactly under softmax over dim=0).
    logits = jnp.dot(h_ref[...], w2_ref[...],
                     preferred_element_type=jnp.float32)          # (B, TN) f32

    # Softmax over the batch axis, independently per output column.
    # Exact f32 XLU reductions; they hide under the output writeback DMA.
    m = jnp.max(logits, axis=0, keepdims=True)                    # (1, TN)
    e = jnp.exp(logits - m)                                       # (B, TN), EUP
    denom = jnp.sum(e, axis=0, keepdims=True)                     # (1, TN)
    # EUP approximate reciprocal + one Newton step holds f32-level accuracy.
    r = pl.reciprocal(denom, approx=True)
    r = r * (2.0 - denom * r)
    out_ref[...] = (e * r).astype(out_ref.dtype)                  # lane-dense bf16 store


def scorenet_forward(x, w1, b1, w2, *, out_dtype=jnp.bfloat16):
    """x: (B, inDim) f32; w1: (inDim, 50); b1: (1, 50); w2: (50, outDim).

    Returns softmax(fc3(sigmoid(fc1(x))), dim=0) with shape (B, outDim) in
    `out_dtype` (bf16 by default — halves the HBM writeback that dominates the
    kernel; pass jnp.float32 if the consumer requires it).
    """
    B, in_dim = x.shape
    out_dim = w2.shape[1]
    TN = _pick_tn(out_dim)
    out_pad = _round_up(out_dim, TN)
    n_col_tiles = out_pad // TN
    out_nbytes = jnp.dtype(out_dtype).itemsize

    # Zero-pad to lane-dense shapes. Padded hidden units produce sigmoid(0)=0.5
    # but multiply zero rows of w2 -> logits unchanged (exact). Padded output
    # columns get uniform 1/B softmax values and are sliced off below (exact).
    w1p = jnp.zeros((in_dim, HIDDEN_PAD), jnp.float32).at[:, :HIDDEN].set(w1)
    b1p = jnp.zeros((1, HIDDEN_PAD), jnp.float32).at[:, :HIDDEN].set(b1)
    w2p = jnp.zeros((HIDDEN_PAD, out_pad), jnp.float32).at[:HIDDEN, :out_dim].set(w2)

    # bf16 MXU operands (halve HBM->VMEM bytes for x / weights / h).
    xb = x.astype(jnp.bfloat16)
    w1b = w1p.astype(jnp.bfloat16)
    w2b = w2p.astype(jnp.bfloat16)

    # ---- fc1 + sigmoid: single kernel invocation, whole arrays resident -----
    h_bf16 = pl.pallas_call(
        fc1_kernel,
        out_shape=jax.ShapeDtypeStruct((B, HIDDEN_PAD), jnp.bfloat16),
    )(xb, w1b, b1p)

    # ---- fc3 + softmax(dim=0): grid over output-column tiles ----------------
    # Explicit VMEM budget (double-buffered h / w2 tile / out tile + f32
    # intermediates), floored at the 32 MiB scoped default and capped at 64 MiB
    # so the same number is valid on v7x.
    vmem_bytes = (
        2 * B * HIDDEN_PAD * 2          # h (bf16), double-buffered
        + 2 * HIDDEN_PAD * TN * 2       # w2 column tile (bf16), double-buffered
        + 2 * B * TN * out_nbytes       # output tile, double-buffered
        + 3 * B * TN * 4                # f32 intermediates (logits, e, e*r)
    )
    vmem_limit = int(min(max(vmem_bytes + (4 << 20), 32 << 20), 64 << 20))

    cost = pl.CostEstimate(
        flops=2 * B * HIDDEN_PAD * out_pad,                      # fc3 MACs over all tiles
        transcendentals=B * out_pad + out_pad,                   # exp + reciprocal
        bytes_accessed=(B * HIDDEN_PAD * 2                       # h (bf16)
                        + HIDDEN_PAD * out_pad * 2               # w2 (bf16)
                        + B * out_pad * out_nbytes),             # output
    )

    out_padded = pl.pallas_call(
        fc3_softmax_kernel,
        out_shape=jax.ShapeDtypeStruct((B, out_pad), out_dtype),
        grid=(n_col_tiles,),
        in_specs=[
            # h: constant index_map -> stays resident, DMA'd once.
            pl.BlockSpec((B, HIDDEN_PAD), lambda j: (0, 0)),
            # w2: one lane-dense column tile per grid step.
            pl.BlockSpec((HIDDEN_PAD, TN), lambda j: (0, j)),
        ],
        out_specs=pl.BlockSpec((B, TN), lambda j: (0, j)),
        compiler_params=pltpu.CompilerParams(
            # "parallel" engages the second v7x TensorCore only when
            # n_col_tiles >= 2 (out_dim > TN); for small out_dim + huge B a
            # batch-tiled two-pass softmax would be needed for a megacore win.
            dimension_semantics=("parallel",),
            vmem_limit_bytes=vmem_limit,
        ),
        cost_estimate=cost,
    )(h_bf16, w2b)

    return out_padded[:, :out_dim]


def init_params(key, in_dim, out_dim):
    """PyTorch nn.Linear default init: U(-1/sqrt(fan_in), 1/sqrt(fan_in))."""
    k1, k2, k3, k4 = jax.random.split(key, 4)
    bound1 = 1.0 / (in_dim ** 0.5)
    bound2 = 1.0 / (HIDDEN ** 0.5)
    # Stored as (in, out) so the kernels compute x @ W + b.
    w1 = jax.random.uniform(k1, (in_dim, HIDDEN), jnp.float32, -bound1, bound1)
    b1 = jax.random.uniform(k2, (1, HIDDEN), jnp.float32, -bound1, bound1)
    w2 = jax.random.uniform(k3, (HIDDEN, out_dim), jnp.float32, -bound2, bound2)
    b2 = jax.random.uniform(k4, (1, out_dim), jnp.float32, -bound2, bound2)
    return w1, b1, w2, b2


def reference_forward(x, w1, b1, w2, b2):
    """Pure-JAX f32 reference matching the PyTorch module (including b2)."""
    h = jax.nn.sigmoid(x @ w1 + b1)
    logits = h @ w2 + b2
    return jax.nn.softmax(logits, axis=0)


if __name__ == "__main__":
    key = jax.random.PRNGKey(0)
    kx, kp = jax.random.split(key)

    B, in_dim, out_dim = 8, 32, 4
    x = jax.random.normal(kx, (B, in_dim), jnp.float32)
    w1, b1, w2, b2 = init_params(kp, in_dim, out_dim)

    # b2 intentionally not passed: softmax over dim=0 cancels it exactly.
    out = scorenet_forward(x, w1, b1, w2)          # bf16 output (default)
    out = jax.block_until_ready(out)

    ref = reference_forward(x, w1, b1, w2, b2)
    assert out.shape == (B, out_dim)

    out_f32 = out.astype(jnp.float32)
    # bf16 MXU operands + bf16 output store -> compare at bf16-scale tolerance.
    assert jnp.allclose(out_f32, ref, atol=3e-2, rtol=3e-2), "mismatch vs pure-JAX reference"
    # softmax over dim=0 -> each column sums to 1 (checked at bf16-output tolerance).
    assert jnp.allclose(jnp.sum(out_f32, axis=0), jnp.ones((out_dim,)), atol=3e-2)

    print("KERNEL_OK")
</pallas_src>

<mosaic_0001>
module attributes {stable_mosaic.version = 11 : i64} {
  func.func @fc1_kernel(%arg0: memref<8x32xbf16, #tpu.memory_space<vmem>>, %arg1: memref<32x128xbf16, #tpu.memory_space<vmem>>, %arg2: memref<1x128xf32, #tpu.memory_space<vmem>>, %arg3: memref<8x128xbf16, #tpu.memory_space<vmem>>) attributes {dimension_semantics = [], scalar_prefetch = 0 : i64, scratch_operands = 0 : i64, tpu.core_type = #tpu.core_type<tc>} {
    %c0 = arith.constant 0 : index
    %c0_0 = arith.constant 0 : index
    %0 = vector.load %arg0[%c0, %c0_0] : memref<8x32xbf16, #tpu.memory_space<vmem>>, vector<8x32xbf16>
    %c0_1 = arith.constant 0 : index
    %c0_2 = arith.constant 0 : index
    %1 = vector.load %arg1[%c0_1, %c0_2] : memref<32x128xbf16, #tpu.memory_space<vmem>>, vector<32x128xbf16>
    %cst = arith.constant dense<0.000000e+00> : vector<8x128xf32>
    %2 = tpu.matmul %0, %1, %cst {dimension_numbers = #tpu.dot_dimension_numbers<[1], [0], [0], [1], [0, 0, 1, 1], [], []>} : vector<8x32xbf16>, vector<32x128xbf16>, vector<8x128xf32> -> vector<8x128xf32>
    %c0_3 = arith.constant 0 : index
    %c0_4 = arith.constant 0 : index
    %3 = vector.load %arg2[%c0_3, %c0_4] : memref<1x128xf32, #tpu.memory_space<vmem>>, vector<1x128xf32>
    %4 = vector.broadcast %3 : vector<1x128xf32> to vector<8x128xf32>
    %5 = arith.addf %2, %4 : vector<8x128xf32>
    %6 = arith.negf %5 : vector<8x128xf32>
    %7 = math.exp %6 : vector<8x128xf32>
    %cst_5 = arith.constant 1.000000e+00 : f32
    %8 = vector.broadcast %cst_5 : f32 to vector<8x128xf32>
    %9 = arith.addf %8, %7 : vector<8x128xf32>
    %10 = arith.divf %8, %9 : vector<8x128xf32>
    %11 = arith.truncf %10 : vector<8x128xf32> to vector<8x128xbf16>
    %c0_6 = arith.constant 0 : index
    %c0_7 = arith.constant 0 : index
    %12 = vector.load %arg3[%c0_6, %c0_7] : memref<8x128xbf16, #tpu.memory_space<vmem>>, vector<8x128xbf16>
    tpu.vector_store %arg3[%c0_6, %c0_7], %11 {strides = array<i32>} : memref<8x128xbf16, #tpu.memory_space<vmem>>, vector<8x128xbf16>,
    return
  }
}

</mosaic_0001>

<llo_original>
// kernel: tpu_custom_call.1
$region0: #{tpu_custom_call.1}
  #allocation0 [shape = 'u32[]', space=smem, size = 0x4, offset = 0x4, fixed_abs, tag = 'smem constant byte address 0x4 - core index']
  #allocation1 [shape = 'u32[144,128]{1,0:T(1,128)}', space=vmem, size = 0x12000, scoped, tag = 'internal scratch']
  %s0 = inlined_call_operand.hbm [shape: bf16[8,32], index: 0, kind: input, shape index: {}]
  %s1 = inlined_call_operand.hbm [shape: bf16[32,128], index: 1, kind: input, shape index: {}]
  %s2 = inlined_call_operand.vmem [shape: f32[1,128], index: 2, kind: input, shape index: {}]
  %s3 = inlined_call_operand.hbm [shape: bf16[8,128], index: 3, kind: output, shape index: {}]
  %s4 = sld [smem:[#allocation0]]
  $region30: #{tpu_custom_call.1} parent=0
    _
  %s6 = ssub.s32 1, %s4
  %s7 = scalar_select 0, %s6, %s4
  $region1: #{tpu_custom_call.1} parent=0
    #allocation2 [shape = 'u8[2048]{0}', space=vmem, size = 0x800, scoped, tag = 'input window, operand 0, single buffered']
    #allocation3 [shape = 's32[1]{0}', space=sflag, size = 0x4, scoped, tag = 'scoped memory for tpu_custom_call.1']
    #allocation4 [shape = 's32[1]{0}', space=sflag, size = 0x4, scoped, tag = 'scoped memory for tpu_custom_call.1']
    #allocation5 [shape = 'u8[8192]{0}', space=vmem, size = 0x2000, scoped, tag = 'input window, operand 1, single buffered']
    #allocation6 [shape = 's32[1]{0}', space=sflag, size = 0x4, scoped, tag = 'scoped memory for tpu_custom_call.1']
    #allocation7 [shape = 'u8[2048]{0}', space=vmem, size = 0x800, scoped, tag = 'output window, operand 0, single buffered']
    %8 = vsyncpa [#allocation3], 0
    %9 = vsyncpa [#allocation6], 0
    %10 = vsyncpa [#allocation4], 0
    // Predicated region
    $region2: #{tpu_custom_call.1} parent=1 // pred_check
      _
    $region3: #{tpu_custom_call.1} parent=1 // pred_check_branch
      %12 = sbr.rel (0) target = $region5
    $region4: #{tpu_custom_call.1} parent=1 // pred_region
      %s14 = ssub.s32 64, 64
      %15 = vsyncadd [#allocation3], %s14
      %s17 = sshll.u32 [#allocation2], 4
      %s18 = int_to_ptr.vmem [resolvable:$true] %s17
      %20 = dma.hbm_to_vmem [thread:$0]  %s0, 64, %s18, [#allocation3]
    $region5: #{tpu_custom_call.1} parent=1 // pred_fallthru
      _
    // Predicated region
    $region6: #{tpu_custom_call.1} parent=1 // pred_check
      _
    $region7: #{tpu_custom_call.1} parent=1 // pred_check_branch
      %22 = sbr.rel (0) target = $region9
    $region8: #{tpu_custom_call.1} parent=1 // pred_region
      %s24 = ssub.s32 256, 256
      %25 = vsyncadd [#allocation6], %s24
      %s26 = sshll.u32 [#allocation5], 4
      %s27 = int_to_ptr.vmem [resolvable:$true] %s26
      %32 = dma.hbm_to_vmem [thread:$0]  %s1, 256, %s27, [#allocation6], 64, 64, 4
    $region9: #{tpu_custom_call.1} parent=1 // pred_fallthru
      _
    // Predicated region
    $region10: #{tpu_custom_call.1} parent=1 // pred_check
      _
    $region11: #{tpu_custom_call.1} parent=1 // pred_check_branch
      %34 = sbr.rel (0) target = $region13
    $region12: #{tpu_custom_call.1} parent=1 // pred_region
      _
    $region13: #{tpu_custom_call.1} parent=1 // pred_fallthru
      _
    // Predicated region
    $region14: #{tpu_custom_call.1} parent=1 // pred_check
      _
    $region15: #{tpu_custom_call.1} parent=1 // pred_check_branch
      %36 = sbr.rel (0) target = $region17
    $region16: #{tpu_custom_call.1} parent=1 // pred_region
      %37 = dma.done [#allocation3], 64
    $region17: #{tpu_custom_call.1} parent=1 // pred_fallthru
      _
    // Predicated region
    $region18: #{tpu_custom_call.1} parent=1 // pred_check
      _
    $region19: #{tpu_custom_call.1} parent=1 // pred_check_branch
      %39 = sbr.rel (0) target = $region21
    $region20: #{tpu_custom_call.1} parent=1 // pred_region
      %40 = dma.done [#allocation6], 256
    $region21: #{tpu_custom_call.1} parent=1 // pred_fallthru
      _
    %v42 = vld [vmem:[#allocation2] sm:$0xf]
    %v43 = vld [vmem:[#allocation5] sm:$0xf]
    %v44 = vld [vmem:[#allocation5 + $0x4] sm:$0xf]
    %v45 = vld [vmem:[#allocation5 + $0x8] sm:$0xf]
    %v46 = vld [vmem:[#allocation5 + $0xc] sm:$0xf]
    %v47 = vld [vmem:[%s2] sm:$0x1]
    %v49 = vlaneseq
    %v50 = vshrl.u32 %v49, 7
    %v51 = vsub.s32 0, %v50
    %v52 = vrot.slane %v47, %v51
    %v58 = vunpack.c.l.b16 %v43
    %v59 = vunpack.c.l.b16 %v44
    %v60 = vunpack.c.l.b16 %v45
    %v61 = vunpack.c.l.b16 %v46
    %v62 = vpack.c.b16 %v59, %v58
    %v63 = vpack.c.b16 %v61, %v60
    %vm66 = vcmask 261120
    %v68 = vsel %vm66, %v42, 0
    %70 = vmatprep.subr.bf16.mxu0 0
    %71 = vmatpush1.bf16.msra.mxu0 0
    %72 = vmatprep.subr.bf16.mxu0 0
    %73 = vmatpush1.bf16.msra.mxu0 0
    %74 = vmatprep.subr.bf16.mxu0 0
    %75 = vmatpush1.bf16.msra.mxu0 0
    %76 = vmatprep.subr.bf16.mxu0 0
    %77 = vmatpush1.bf16.msra.mxu0 0
    %78 = vmatprep.subr.bf16.mxu0 0
    %79 = vmatpush1.bf16.msra.mxu0 0
    %80 = vmatprep.subr.bf16.mxu0 0
    %81 = vmatpush1.bf16.msra.mxu0 0
    %82 = vmatprep.subr.bf16.mxu0 0
    %83 = vmatpush1.bf16.msra.mxu0 %v63
    %84 = vmatprep.subr.bf16.mxu0 0
    %85 = vmatpush1.bf16.msra.mxu0 %v62
    %86 = vmatprep.subr.bf16.mxu0 0
    %87 = vmatpush2.bf16.msra.mxu0 0
    %88 = vmatprep.subr.bf16.mxu0 0
    %89 = vmatpush2.bf16.msra.mxu0 0
    %90 = vmatprep.subr.bf16.mxu0 0
    %91 = vmatpush2.bf16.msra.mxu0 0
    %92 = vmatprep.subr.bf16.mxu0 0
    %93 = vmatpush2.bf16.msra.mxu0 0
    %94 = vmatprep.subr.bf16.mxu0 0
    %95 = vmatpush2.bf16.msra.mxu0 0
    %96 = vmatprep.subr.bf16.mxu0 0
    %97 = vmatpush2.bf16.msra.mxu0 0
    %98 = vmatprep.subr.bf16.mxu0 0
    %99 = vmatpush2.bf16.msra.mxu0 0
    %100 = vmatprep.subr.bf16.mxu0 0
    %101 = vmatpush2.bf16.msra.mxu0 0
    %102 = vmatprep.mubr.bf16.mxu0 0
    %103 = vmatmul.mubr.bf16.gmra.mxu0 %v68
    %v104 = vpop.f32.mrf.mxu0
    %v105 = vadd.f32 %v52, %v104
    %v106 = vpop.f32.mrf.mxu0
    %v107 = vpop.f32.mrf.mxu0
    %v108 = vpop.f32.mrf.mxu0
    %109 = vdwg.mxu0
    %v110 = vxor.u32 %v105, 2147483648
    %v111 = vmul.f32 %v110, 1.442695
    %v112 = vpow.pop %v111
    %v113 = vadd.f32 %v112, 1.0
    %v114 = vrcp.pop %v113
    %v115 = vmul.f32 1.0, %v114
    %v116 = vpack.c.bf16 %v115, %v115
    %117 = vst [vmem:[#allocation7] sm:$0xf] %v116
    // Predicated region
    $region22: #{tpu_custom_call.1} parent=1 // pred_check
      _
    $region23: #{tpu_custom_call.1} parent=1 // pred_check_branch
      %119 = sbr.rel (0) target = $region25
    $region24: #{tpu_custom_call.1} parent=1 // pred_region
      %s121 = ssub.s32 64, 64
      %122 = vsyncadd [#allocation4], %s121
      %s124 = sshll.u32 [#allocation7], 4
      %s125 = int_to_ptr.vmem [resolvable:$true] %s124
      %127 = dma.vmem_to_hbm [thread:$0]  %s125, 64, %s3, [#allocation4]
    $region25: #{tpu_custom_call.1} parent=1 // pred_fallthru
      _
    // Predicated region
    $region26: #{tpu_custom_call.1} parent=1 // pred_check
      _
    $region27: #{tpu_custom_call.1} parent=1 // pred_check_branch
      %129 = sbr.rel (0) target = $region29
    $region28: #{tpu_custom_call.1} parent=1 // pred_region
      %130 = dma.done [#allocation4], 64
    $region29: #{tpu_custom_call.1} parent=1 // pred_fallthru
      _
    %131 = vsyncpa [#allocation3], 1
    %132 = vsyncpa [#allocation6], 1
    %133 = vsyncpa [#allocation4], 1

</llo_original>
